<compile_context>
chip_gen: v6e
topology: v6e:2x2x1
jax: 0.10.0
libtpu: 0.0.40
codegen_flags: <defaults>
</compile_context>

<pallas_src>
import jax
import jax.numpy as jnp
from jax.experimental import pallas as pl
from jax.experimental.pallas import tpu as pltpu

_LANE = 128


def _silu(v):
    # x * sigmoid(x) == 0.5 * x * (1 + tanh(x/2)); tanh is a single EUP op (no divide).
    return 0.5 * v * (1.0 + jnp.tanh(0.5 * v))


def one_d_embedder_kernel(x_ref, w1_ref, b1_ref, w2_ref, b2_ref, o_ref):
    # x_ref : (1, C_in, tT)   w1_ref: (E, C_in)   b1_ref: (E, 1)
    # w2_ref: (E, E)          b2_ref: (E, 1)      o_ref : (1, tT, E)
    x = x_ref[0]                                              # (C_in, tT), native dtype

    # Conv1d(C_in -> E, k=1): h = W1 @ x + b1 (f32 accumulation on the MXU),
    # computed lane-dense with T on the 128-lane axis.
    h = jnp.dot(w1_ref[...], x, preferred_element_type=jnp.float32) + b1_ref[...]
    h = _silu(h)
    # TODO(synk): nn.Dropout(0.1) is identity in eval mode; training-mode dropout
    # (PRNG mask + 1/(1-p) rescale) is not implemented.

    # Conv1d(E -> E, k=1): y = W2 @ silu(h) + b2
    h = h.astype(w2_ref.dtype)                                # MXU operands in weight dtype
    y = jnp.dot(w2_ref[...], h, preferred_element_type=jnp.float32) + b2_ref[...]
    y = _silu(y)

    # Fused output transpose (XLU): store [tT, E] so the module's [B, T, E] layout comes
    # straight out of the kernel -- no extra HBM transpose pass in the wrapper.
    o_ref[0] = y.T.astype(o_ref.dtype)


def _choose_t_tile(T, B, C_in, E, t_tile, io_bytes, w_bytes):
    """Largest 128-aligned T tile that (a) fits a ~28 MiB double-buffered VMEM working
    set, (b) is <= t_tile, and (c) leaves >= 2 grid steps when B == 1 (v7x megacore)."""
    if T <= _LANE:
        return T                                       # tiny: single full-dim block
    e_lane = pl.cdiv(E, _LANE) * _LANE
    per_col = 2 * C_in * io_bytes + 2 * e_lane * io_bytes + 3 * e_lane * 4
    fixed = 2 * (E * C_in + E * E + 2 * E) * w_bytes   # resident weights (x2 safety)
    budget = 28 * 1024 * 1024
    cap = max(_LANE, (budget - fixed) // max(per_col, 1))
    tt = max(_LANE, min(int(t_tile), int(cap)))
    if B == 1:
        # v7x has 2 TensorCores: make sure the "parallel" grid has >= 2 steps.
        half = pl.cdiv(pl.cdiv(T, 2), _LANE) * _LANE
        tt = min(tt, half)
    tt = max(_LANE, (tt // _LANE) * _LANE)             # keep x blocks lane-dense
    return min(tt, (T // _LANE) * _LANE)               # never exceed T


def one_d_embedder(x, w1, b1, w2, b2, *, t_tile=4096):
    """
    OneDEmbedder forward (eval mode).

    Args:
        x : [B, input_dim, T]          (PyTorch NCT layout)
        w1: [embed_dim, input_dim]     (Conv1d k=1 weight, kernel dim squeezed)
        b1: [embed_dim]
        w2: [embed_dim, embed_dim]
        b2: [embed_dim]
    Returns:
        [B, T, embed_dim] in x.dtype (pass bf16 x/weights for an end-to-end bf16
        pipeline; accumulation stays f32 on the MXU).
    """
    B, C_in, T = x.shape
    E = w1.shape[0]
    io_bytes = jnp.dtype(x.dtype).itemsize
    w_bytes = jnp.dtype(w1.dtype).itemsize

    tT = _choose_t_tile(T, B, C_in, E, t_tile, io_bytes, w_bytes)
    grid = (B, pl.cdiv(T, tT))          # ragged T tail handled by Pallas boundary masking

    b1_c = b1.reshape(E, 1)
    b2_c = b2.reshape(E, 1)

    # VMEM budget: double-buffered x/out blocks + resident weights + f32 temporaries
    # (h, y, y^T).  Capped at 48 MiB so v7x (64 MiB physical) keeps headroom.
    e_lane = pl.cdiv(E, _LANE) * _LANE
    need = (2 * C_in * tT * io_bytes
            + 2 * tT * e_lane * io_bytes
            + 2 * (E * C_in + E * E + 2 * E) * w_bytes
            + 3 * e_lane * tT * 4)
    vmem_limit = int(min(48 * 1024 * 1024, max(16 * 1024 * 1024, int(1.5 * need))))

    return pl.pallas_call(
        one_d_embedder_kernel,
        out_shape=jax.ShapeDtypeStruct((B, T, E), x.dtype),
        grid_spec=pltpu.PrefetchScalarGridSpec(
            num_scalar_prefetch=0,
            grid=grid,
            in_specs=[
                pl.BlockSpec((1, C_in, tT), lambda b, t: (b, 0, t)),  # x tile (T on lanes)
                pl.BlockSpec((E, C_in), lambda b, t: (0, 0)),         # W1 (resident)
                pl.BlockSpec((E, 1), lambda b, t: (0, 0)),            # b1
                pl.BlockSpec((E, E), lambda b, t: (0, 0)),            # W2 (resident)
                pl.BlockSpec((E, 1), lambda b, t: (0, 0)),            # b2
            ],
            out_specs=pl.BlockSpec((1, tT, E), lambda b, t: (b, t, 0)),  # [B,T,E] directly
        ),
        compiler_params=pltpu.CompilerParams(
            dimension_semantics=("parallel", "parallel"),
            vmem_limit_bytes=vmem_limit,
        ),
    )(x, w1, b1_c, w2, b2_c)


def reference(x, w1, b1, w2, b2):
    # Pure-JAX reference of the PyTorch forward (eval mode).
    h = jnp.einsum("ec,bct->bet", w1, x) + b1[None, :, None]
    h = h * jax.nn.sigmoid(h)
    y = jnp.einsum("ef,bft->bet", w2, h) + b2[None, :, None]
    y = y * jax.nn.sigmoid(y)
    return jnp.transpose(y, (0, 2, 1))


if __name__ == "__main__":
    # input_dim=16, embed_dim=128 (a multiple of 128, like the real module's 1536), batch=2.
    B, C_in, E = 2, 16, 128

    key = jax.random.PRNGKey(0)
    kx1, kx2, kw1, kb1, kw2, kb2 = jax.random.split(key, 6)

    # Deterministic, PyTorch-ish scaled init (Conv1d k=1 weights, kernel dim squeezed).
    w1 = jax.random.uniform(kw1, (E, C_in), jnp.float32, -1.0, 1.0) / jnp.sqrt(C_in)
    b1 = jax.random.uniform(kb1, (E,), jnp.float32, -1.0, 1.0) / jnp.sqrt(C_in)
    w2 = jax.random.uniform(kw2, (E, E), jnp.float32, -1.0, 1.0) / jnp.sqrt(E)
    b2 = jax.random.uniform(kb2, (E,), jnp.float32, -1.0, 1.0) / jnp.sqrt(E)

    # 1) Aligned T: one big lane-dense tile per batch row, grid (B, 1).
    T1 = 256
    x1 = jax.random.normal(kx1, (B, C_in, T1), dtype=jnp.float32)
    out1 = one_d_embedder(x1, w1, b1, w2, b2)
    jax.block_until_ready(out1)
    assert out1.shape == (B, T1, E), out1.shape
    assert jnp.allclose(out1, reference(x1, w1, b1, w2, b2), atol=2e-4, rtol=2e-4), \
        "mismatch vs reference (aligned T)"

    # 2) Ragged T (not a multiple of the 128-wide tile): exercises the no-pad/no-slice
    #    boundary-block masking path.
    T2 = 200
    x2 = jax.random.normal(kx2, (B, C_in, T2), dtype=jnp.float32)
    out2 = one_d_embedder(x2, w1, b1, w2, b2, t_tile=128)
    jax.block_until_ready(out2)
    assert out2.shape == (B, T2, E), out2.shape
    assert jnp.allclose(out2, reference(x2, w1, b1, w2, b2), atol=2e-4, rtol=2e-4), \
        "mismatch vs reference (ragged T)"

    print("KERNEL_OK")
</pallas_src>

<mosaic_0001>
module attributes {stable_mosaic.version = 11 : i64} {
  func.func @one_d_embedder_kernel(%arg0: i32, %arg1: i32, %arg2: memref<1x16x256xf32, #tpu.memory_space<vmem>>, %arg3: memref<128x16xf32, #tpu.memory_space<vmem>>, %arg4: memref<128x1xf32, #tpu.memory_space<vmem>>, %arg5: memref<128x128xf32, #tpu.memory_space<vmem>>, %arg6: memref<128x1xf32, #tpu.memory_space<vmem>>, %arg7: memref<1x256x128xf32, #tpu.memory_space<vmem>>) attributes {dimension_semantics = [#tpu.dimension_semantics<parallel>, #tpu.dimension_semantics<parallel>], iteration_bounds = array<i64: 2, 1>, scalar_prefetch = 0 : i64, scratch_operands = 0 : i64, tpu.core_type = #tpu.core_type<tc>, window_params = [{transform_indices = @transform_0, window_bounds = array<i64: 1, 16, 256>}, {pipeline_mode = #tpu.pipeline_mode<synchronous>, transform_indices = @transform_1, window_bounds = array<i64: 128, 16>}, {pipeline_mode = #tpu.pipeline_mode<synchronous>, transform_indices = @transform_2, window_bounds = array<i64: 128, 1>}, {pipeline_mode = #tpu.pipeline_mode<synchronous>, transform_indices = @transform_3, window_bounds = array<i64: 128, 128>}, {pipeline_mode = #tpu.pipeline_mode<synchronous>, transform_indices = @transform_4, window_bounds = array<i64: 128, 1>}, {transform_indices = @transform_5, window_bounds = array<i64: 1, 256, 128>}]} {
    %c0 = arith.constant 0 : index
    %c0_0 = arith.constant 0 : index
    %c0_1 = arith.constant 0 : index
    %0 = vector.load %arg2[%c0, %c0_0, %c0_1] : memref<1x16x256xf32, #tpu.memory_space<vmem>>, vector<1x16x256xf32>
    %1 = vector.shape_cast %0 : vector<1x16x256xf32> to vector<16x256xf32>
    %c0_2 = arith.constant 0 : index
    %c0_3 = arith.constant 0 : index
    %2 = vector.load %arg3[%c0_2, %c0_3] : memref<128x16xf32, #tpu.memory_space<vmem>>, vector<128x16xf32>
    %cst = arith.constant dense<0.000000e+00> : vector<128x256xf32>
    %3 = tpu.matmul %2, %1, %cst {dimension_numbers = #tpu.dot_dimension_numbers<[1], [0], [0], [1], [0, 0, 1, 1], [], []>} : vector<128x16xf32>, vector<16x256xf32>, vector<128x256xf32> -> vector<128x256xf32>
    %c0_4 = arith.constant 0 : index
    %c0_5 = arith.constant 0 : index
    %4 = vector.load %arg4[%c0_4, %c0_5] : memref<128x1xf32, #tpu.memory_space<vmem>>, vector<128x1xf32>
    %5 = vector.broadcast %4 : vector<128x1xf32> to vector<128x256xf32>
    %6 = arith.addf %3, %5 : vector<128x256xf32>
    %cst_6 = arith.constant 5.000000e-01 : f32
    %7 = vector.broadcast %cst_6 : f32 to vector<128x256xf32>
    %8 = arith.mulf %7, %6 : vector<128x256xf32>
    %cst_7 = arith.constant 5.000000e-01 : f32
    %9 = vector.broadcast %cst_7 : f32 to vector<128x256xf32>
    %10 = arith.mulf %9, %6 : vector<128x256xf32>
    %11 = math.tanh %10 : vector<128x256xf32>
    %cst_8 = arith.constant 1.000000e+00 : f32
    %12 = vector.broadcast %cst_8 : f32 to vector<128x256xf32>
    %13 = arith.addf %12, %11 : vector<128x256xf32>
    %14 = arith.mulf %8, %13 : vector<128x256xf32>
    %c0_9 = arith.constant 0 : index
    %c0_10 = arith.constant 0 : index
    %15 = vector.load %arg5[%c0_9, %c0_10] : memref<128x128xf32, #tpu.memory_space<vmem>>, vector<128x128xf32>
    %cst_11 = arith.constant dense<0.000000e+00> : vector<128x256xf32>
    %16 = tpu.matmul %15, %14, %cst_11 {dimension_numbers = #tpu.dot_dimension_numbers<[1], [0], [0], [1], [0, 0, 1, 1], [], []>} : vector<128x128xf32>, vector<128x256xf32>, vector<128x256xf32> -> vector<128x256xf32>
    %c0_12 = arith.constant 0 : index
    %c0_13 = arith.constant 0 : index
    %17 = vector.load %arg6[%c0_12, %c0_13] : memref<128x1xf32, #tpu.memory_space<vmem>>, vector<128x1xf32>
    %18 = vector.broadcast %17 : vector<128x1xf32> to vector<128x256xf32>
    %19 = arith.addf %16, %18 : vector<128x256xf32>
    %cst_14 = arith.constant 5.000000e-01 : f32
    %20 = vector.broadcast %cst_14 : f32 to vector<128x256xf32>
    %21 = arith.mulf %20, %19 : vector<128x256xf32>
    %cst_15 = arith.constant 5.000000e-01 : f32
    %22 = vector.broadcast %cst_15 : f32 to vector<128x256xf32>
    %23 = arith.mulf %22, %19 : vector<128x256xf32>
    %24 = math.tanh %23 : vector<128x256xf32>
    %cst_16 = arith.constant 1.000000e+00 : f32
    %25 = vector.broadcast %cst_16 : f32 to vector<128x256xf32>
    %26 = arith.addf %25, %24 : vector<128x256xf32>
    %27 = arith.mulf %21, %26 : vector<128x256xf32>
    %28 = tpu.transpose %27, [1, 0] : vector<128x256xf32> -> vector<256x128xf32>
    %c0_17 = arith.constant 0 : index
    %c0_18 = arith.constant 0 : index
    %c0_19 = arith.constant 0 : index
    %29 = vector.load %arg7[%c0_17, %c0_18, %c0_19] : memref<1x256x128xf32, #tpu.memory_space<vmem>>, vector<1x256x128xf32>
    %30 = vector.shape_cast %29 : vector<1x256x128xf32> to vector<256x128xf32>
    %31 = vector.shape_cast %28 : vector<256x128xf32> to vector<1x256x128xf32>
    tpu.vector_store %arg7[%c0_17, %c0_18, %c0_19], %31 {strides = array<i32>} : memref<1x256x128xf32, #tpu.memory_space<vmem>>, vector<1x256x128xf32>,
    return
  }
  func.func @transform_0(%arg0: i32, %arg1: i32) -> (i32, i32, i32) {
    %c0_i32 = arith.constant 0 : i32
    %c0_i32_0 = arith.constant 0 : i32
    return %arg0, %c0_i32, %arg1 : i32, i32, i32
  }
  func.func @transform_1(%arg0: i32, %arg1: i32) -> (i32, i32) {
    %c0_i32 = arith.constant 0 : i32
    %c0_i32_0 = arith.constant 0 : i32
    %c0_i32_1 = arith.constant 0 : i32
    return %c0_i32, %c0_i32_0 : i32, i32
  }
  func.func @transform_2(%arg0: i32, %arg1: i32) -> (i32, i32) {
    %c0_i32 = arith.constant 0 : i32
    %c0_i32_0 = arith.constant 0 : i32
    %c0_i32_1 = arith.constant 0 : i32
    return %c0_i32, %c0_i32_0 : i32, i32
  }
  func.func @transform_3(%arg0: i32, %arg1: i32) -> (i32, i32) {
    %c0_i32 = arith.constant 0 : i32
    %c0_i32_0 = arith.constant 0 : i32
    %c0_i32_1 = arith.constant 0 : i32
    return %c0_i32, %c0_i32_0 : i32, i32
  }
  func.func @transform_4(%arg0: i32, %arg1: i32) -> (i32, i32) {
    %c0_i32 = arith.constant 0 : i32
    %c0_i32_0 = arith.constant 0 : i32
    %c0_i32_1 = arith.constant 0 : i32
    return %c0_i32, %c0_i32_0 : i32, i32
  }
  func.func @transform_5(%arg0: i32, %arg1: i32) -> (i32, i32, i32) {
    %c0_i32 = arith.constant 0 : i32
    %c0_i32_0 = arith.constant 0 : i32
    return %arg0, %arg1, %c0_i32 : i32, i32, i32
  }
}

</mosaic_0001>

<llo_original>
// kernel: tpu_custom_call.1
$region0: #{tpu_custom_call.1}
  #allocation0 [shape = 'u32[]', space=smem, size = 0x4, offset = 0x4, fixed_abs, tag = 'smem constant byte address 0x4 - core index']
  #allocation1 [shape = 'u32[144,128]{1,0:T(1,128)}', space=vmem, size = 0x12000, scoped, tag = 'internal scratch']
  %s0 = inlined_call_operand.vmem [shape: f32[2,16,256], index: 0, kind: input, shape index: {}]
  %s1 = inlined_call_operand.vmem [shape: f32[128,16], index: 1, kind: input, shape index: {}]
  %s2 = inlined_call_operand.vmem [shape: f32[128,1], index: 2, kind: input, shape index: {}]
  %s3 = inlined_call_operand.vmem [shape: f32[128,128], index: 3, kind: input, shape index: {}]
  %s4 = inlined_call_operand.vmem [shape: f32[128,1], index: 4, kind: input, shape index: {}]
  %s5 = inlined_call_operand.hbm [shape: f32[2,256,128], index: 5, kind: output, shape index: {}]
  %s6 = sld [smem:[#allocation0]]
  $region53: #{tpu_custom_call.1} parent=0
    _
  %s8 = ssub.s32 1, %s6
  %s9 = scalar_select 0, %s8, %s6
  $region1: #{tpu_custom_call.1} parent=0
    #allocation2 [shape = 'u8[262144]{0}', space=vmem, size = 0x40000, scoped, tag = 'output window, operand 0']
    #allocation3 [shape = 's32[2]{0}', space=sflag, size = 0x8, scoped, tag = 'scoped memory for tpu_custom_call.1']
    %10 = vsyncpa [#allocation3], 0
    %s11 = scalar_lea.sflag [#allocation3], 1
    %12 = vsyncpa %s11, 0
    loop: start=0, step=1, limit=4
    $region2: #{tpu_custom_call.1} parent=1 // loop_pre_header
      _
    $region3: #{tpu_custom_call.1} parent=1 // loop_header
      %s14 = sphi 0, %s18
      %p15 = scmp.ge.s32.totalorder %s14, 4
      %s21 = sphi 0, %s33
      %s22 = sphi 0, %s29
      %s23 = sphi 0, %s21
      %s24 = sphi 0, %s22
      %s25 = sphi 0, %s23
      %s26 = sphi 0, %s24
      %s38 = sphi 0, %s40
      %s41 = sphi 0, %s38
      %s42 = sphi 0, %s41
      %s58 = sphi 0, %s42
      %s62 = sphi 0, %s62
      %s64 = sphi 0, %s62
      %s65 = sphi 0, %s64
      %s79 = sphi 0, %s65
      %s83 = sphi 0, %s83
      %s85 = sphi 0, %s83
      %s86 = sphi 0, %s85
      %s100 = sphi 0, %s86
      %s104 = sphi 0, %s104
      %s106 = sphi 0, %s104
      %s107 = sphi 0, %s106
      %s121 = sphi 0, %s107
      %s125 = sphi 0, %s125
      %s127 = sphi 0, %s125
      %s128 = sphi 0, %s127
      %s142 = sphi 0, %s128
      %s150 = sphi 0, %s152
      %s153 = sphi 0, %s150
      %s154 = sphi 0, %s153
      %s170 = sphi 0, %s154
    $region4: #{tpu_custom_call.1} parent=1 // loop_header_branch
      %17 = sbr.rel (%p15) target = $region8
    $region5: #{tpu_custom_call.1} parent=1 // loop_body
      %s19 = ssub.s32 %s14, 1
      %s20 = ssub.s32 %s14, 2
      %s27 = sadd.s32 1, %s22
      %p28 = scmp.ge.s32.totalorder %s27, 1
      %s29 = scalar_select %p28, 0, %s27
      %s30 = sadd.s32 1, %s21
      %s31 = scalar_select %p28, %s30, %s21
      %p32 = scmp.ge.s32.totalorder %s31, 2
      %s33 = scalar_select %p32, 0, %s31
      %s34 = ssub.s32 %s21, %s33
      %s35 = ssub.s32 %s22, %s29
      %s36 = sor.u32 %s34, %s35
      %p37 = scmp.eq.s32.totalorder %s36, 0
      %s39 = sadd.s32 %s38, 1
      %s40 = scalar_select %p37, %s38, %s39
      %p43 = pneg %p37
      %p44 = scmp.eq.s32.totalorder %s14, 1
      %p45 = por %p43, %p44
      %p46 = scmp.ne.s32.totalorder %s38, %s41
      %p47 = scmp.eq.s32.totalorder %s14, 0
      %p48 = por %p46, %p47
      %p49 = scmp.ne.s32.totalorder %s38, %s41
      %p50 = scmp.eq.s32.totalorder %s19, 1
      %p51 = por %p49, %p50
      %p52 = scmp.ne.s32.totalorder %s41, %s42
      %p53 = scmp.eq.s32.totalorder %s19, 0
      %p54 = por %p52, %p53
      %p55 = scmp.ne.s32.totalorder %s41, %s42
      %p56 = scmp.eq.s32.totalorder %s20, 1
      %p57 = por %p55, %p56
      %p59 = scmp.ne.s32.totalorder %s42, %s58
      %p60 = scmp.eq.s32.totalorder %s20, 0
      %p61 = por %p59, %p60
      %s63 = sadd.s32 %s62, 1
      %p66 = scmp.eq.s32.totalorder %s14, 1
      %p67 = scmp.ne.s32.totalorder %s62, %s64
      %p68 = scmp.eq.s32.totalorder %s14, 0
      %p69 = por %p67, %p68
      %p70 = scmp.ne.s32.totalorder %s62, %s64
      %p71 = scmp.eq.s32.totalorder %s19, 1
      %p72 = por %p70, %p71
      %p73 = scmp.ne.s32.totalorder %s64, %s65
      %p74 = scmp.eq.s32.totalorder %s19, 0
      %p75 = por %p73, %p74
      %p76 = scmp.ne.s32.totalorder %s64, %s65
      %p77 = scmp.eq.s32.totalorder %s20, 1
      %p78 = por %p76, %p77
      %p80 = scmp.ne.s32.totalorder %s65, %s79
      %p81 = scmp.eq.s32.totalorder %s20, 0
      %p82 = por %p80, %p81
      %s84 = sadd.s32 %s83, 1
      %p87 = scmp.eq.s32.totalorder %s14, 1
      %p88 = scmp.ne.s32.totalorder %s83, %s85
      %p89 = scmp.eq.s32.totalorder %s14, 0
      %p90 = por %p88, %p89
      %p91 = scmp.ne.s32.totalorder %s83, %s85
      %p92 = scmp.eq.s32.totalorder %s19, 1
      %p93 = por %p91, %p92
      %p94 = scmp.ne.s32.totalorder %s85, %s86
      %p95 = scmp.eq.s32.totalorder %s19, 0
      %p96 = por %p94, %p95
      %p97 = scmp.ne.s32.totalorder %s85, %s86
      %p98 = scmp.eq.s32.totalorder %s20, 1
      %p99 = por %p97, %p98
      %p101 = scmp.ne.s32.totalorder %s86, %s100
      %p102 = scmp.eq.s32.totalorder %s20, 0
      %p103 = por %p101, %p102
      %s105 = sadd.s32 %s104, 1
      %p108 = scmp.eq.s32.totalorder %s14, 1
      %p109 = scmp.ne.s32.totalorder %s104, %s106
      %p110 = scmp.eq.s32.totalorder %s14, 0
      %p111 = por %p109, %p110
      %p112 = scmp.ne.s32.totalorder %s104, %s106
      %p113 = scmp.eq.s32.totalorder %s19, 1
      %p114 = por %p112, %p113
      %p115 = scmp.ne.s32.totalorder %s106, %s107
      %p116 = scmp.eq.s32.totalorder %s19, 0
      %p117 = por %p115, %p116
      %p118 = scmp.ne.s32.totalorder %s106, %s107
      %p119 = scmp.eq.s32.totalorder %s20, 1
      %p120 = por %p118, %p119
      %p122 = scmp.ne.s32.totalorder %s107, %s121
      %p123 = scmp.eq.s32.totalorder %s20, 0
      %p124 = por %p122, %p123
      %s126 = sadd.s32 %s125, 1
      %p129 = scmp.eq.s32.totalorder %s14, 1
      %p130 = scmp.ne.s32.totalorder %s125, %s127
      %p131 = scmp.eq.s32.totalorder %s14, 0
      %p132 = por %p130, %p131
      %p133 = scmp.ne.s32.totalorder %s125, %s127
      %p134 = scmp.eq.s32.totalorder %s19, 1
      %p135 = por %p133, %p134
      %p136 = scmp.ne.s32.totalorder %s127, %s128
      %p137 = scmp.eq.s32.totalorder %s19, 0
      %p138 = por %p136, %p137
      %p139 = scmp.ne.s32.totalorder %s127, %s128
      %p140 = scmp.eq.s32.totalorder %s20, 1
      %p141 = por %p139, %p140
      %p143 = scmp.ne.s32.totalorder %s128, %s142
      %p144 = scmp.eq.s32.totalorder %s20, 0
      %p145 = por %p143, %p144
      %s146 = ssub.s32 %s21, %s33
      %s147 = ssub.s32 %s22, %s29
      %s148 = sor.u32 %s146, %s147
      %p149 = scmp.eq.s32.totalorder %s148, 0
      %s151 = sadd.s32 %s150, 1
      %s152 = scalar_select %p149, %s150, %s151
      %p155 = pneg %p149
      %p156 = scmp.eq.s32.totalorder %s14, 1
      %p157 = por %p155, %p156
      %p158 = scmp.ne.s32.totalorder %s150, %s153
      %p159 = scmp.eq.s32.totalorder %s14, 0
      %p160 = por %p158, %p159
      %p161 = scmp.ne.s32.totalorder %s150, %s153
      %p162 = scmp.eq.s32.totalorder %s19, 1
      %p163 = por %p161, %p162
      %p164 = scmp.ne.s32.totalorder %s153, %s154
      %p165 = scmp.eq.s32.totalorder %s19, 0
      %p166 = por %p164, %p165
      %p167 = scmp.ne.s32.totalorder %s153, %s154
      %p168 = scmp.eq.s32.totalorder %s20, 1
      %p169 = por %p167, %p168
      %p171 = scmp.ne.s32.totalorder %s154, %s170
      %p172 = scmp.eq.s32.totalorder %s20, 0
      %p173 = por %p171, %p172
      %p174 = scmp.le.s32.totalorder 1, %s14
      %p175 = scmp.lt.s32.totalorder %s14, 3
      %p176 = pnand %p174, %p175
      %p177 = pneg %p176
      // Predicated region
      $region9: #{tpu_custom_call.1} parent=5 // pred_check
        _
      $region10: #{tpu_custom_call.1} parent=5 // pred_check_branch
        %179 = sbr.rel (%p176) target = $region12
      $region11: #{tpu_custom_call.1} parent=5 // pred_region
        %s180 = ssub.s32 %s14, 1
        // Predicated region
        $region13: #{tpu_custom_call.1} parent=11 // pred_check
          %p181 = pneg %p75
        $region14: #{tpu_custom_call.1} parent=11 // pred_check_branch
          %183 = sbr.rel (%p181) target = $region16
        $region15: #{tpu_custom_call.1} parent=11 // pred_region
          _
        $region16: #{tpu_custom_call.1} parent=11 // pred_fallthru
          _
        // Predicated region
        $region17: #{tpu_custom_call.1} parent=11 // pred_check
          %p184 = pneg %p96
        $region18: #{tpu_custom_call.1} parent=11 // pred_check_branch
          %186 = sbr.rel (%p184) target = $region20
        $region19: #{tpu_custom_call.1} parent=11 // pred_region
          _
        $region20: #{tpu_custom_call.1} parent=11 // pred_fallthru
          _
        // Predicated region
        $region21: #{tpu_custom_call.1} parent=11 // pred_check
          %p187 = pneg %p117
        $region22: #{tpu_custom_call.1} parent=11 // pred_check_branch
          %189 = sbr.rel (%p187) target = $region24
        $region23: #{tpu_custom_call.1} parent=11 // pred_region
          _
        $region24: #{tpu_custom_call.1} parent=11 // pred_fallthru
          _
        // Predicated region
        $region25: #{tpu_custom_call.1} parent=11 // pred_check
          %p190 = pneg %p138
        $region26: #{tpu_custom_call.1} parent=11 // pred_check_branch
          %192 = sbr.rel (%p190) target = $region28
        $region27: #{tpu_custom_call.1} parent=11 // pred_region
          _
        $region28: #{tpu_custom_call.1} parent=11 // pred_fallthru
          _
      $region12: #{tpu_custom_call.1} parent=5 // pred_fallthru
        _
      %p193 = scmp.lt.s32.totalorder %s14, 2
      // Predicated region
      $region29: #{tpu_custom_call.1} parent=5 // pred_check
        %p194 = pneg %p193
      $region30: #{tpu_custom_call.1} parent=5 // pred_check_branch
        %196 = sbr.rel (%p194) target = $region32
      $region31: #{tpu_custom_call.1} parent=5 // pred_region
        // Predicated region
        $region33: #{tpu_custom_call.1} parent=31 // pred_check
          %p197 = pneg %p48
        $region34: #{tpu_custom_call.1} parent=31 // pred_check_branch
          %199 = sbr.rel (%p197) target = $region36
        $region35: #{tpu_custom_call.1} parent=31 // pred_region
          %s200 = smul.u32 2, %s22
          %p201 = scmp.lt.s32.totalorder %s21, 1
          %s202 = scalar_select %p201, %s21, 1
          %p203 = scmp.lt.s32.totalorder %s200, 1
          %s204 = scalar_select %p203, %s200, 1
          %s205 = smul.addr %s202, 4
          %s206 = sadd.s32 %s204, %s205
          %s207 = smul.addr %s206, 8
          %s208 = scalar_lea.vmem %s0, %s207
          %s209 = smul.u32 2, %s22
        $region36: #{tpu_custom_call.1} parent=31 // pred_fallthru
          _
      $region32: #{tpu_custom_call.1} parent=5 // pred_fallthru
        _
      %p210 = scmp.le.s32.totalorder 1, %s14
      %p211 = scmp.lt.s32.totalorder %s14, 3
      %p212 = pnand %p210, %p211
      %p213 = pneg %p212
      // Predicated region
      $region37: #{tpu_custom_call.1} parent=5 // pred_check
        _
      $region38: #{tpu_custom_call.1} parent=5 // pred_check_branch
        %215 = sbr.rel (%p212) target = $region40
      $region39: #{tpu_custom_call.1} parent=5 // pred_region
        %s216 = ssub.s32 %s14, 1
        %s217 = smul.u32 2, %s24
        %p218 = scmp.lt.s32.totalorder %s23, 1
        %s219 = scalar_select %p218, %s23, 1
        %p220 = scmp.lt.s32.totalorder %s217, 1
        %s221 = scalar_select %p220, %s217, 1
        %s222 = smul.addr %s219, 4
        %s223 = sadd.s32 %s221, %s222
        %s224 = smul.addr %s223, 8
        %s225 = scalar_lea.vmem %s0, %s224
        %p226 = pneg %p54
        %p227 = pneg %p51
        %p228 = pneg %p75
        %p229 = pneg %p72
        %p230 = pneg %p96
        %p231 = pneg %p93
        %p232 = pneg %p117
        %p233 = pneg %p114
        %p234 = pneg %p138
        %p235 = pneg %p135
        %p236 = pneg %p166
        %p237 = pneg %p163
        %s238 = sand.u32 %s153, 1
        %s239 = scalar_lea.sflag [#allocation3], %s238
        %s240 = sand.u32 %s153, 1
        %s241 = smul.addr %s240, 256
        %s242 = scalar_lea.vmem [#allocation2], %s241
        %s243 = smul.u32 2, %s24
        %p244 = scmp.lt.s32.totalorder %s23, 1
        %s245 = scalar_select %p244, %s23, 1
        %p246 = scmp.lt.s32.totalorder %s243, 1
        %s247 = scalar_select %p246, %s243, 1
        %s248 = smul.addr %s245, 4
        %s249 = sadd.s32 %s247, %s248
        %s250 = smul.addr %s249, 8
        %s251 = scalar_lea.vmem %s0, %s250
        %s252 = smul.u32 2, %s24
        %s253 = smul.u32 32, %s24
        %v254 = vld [vmem:[%s251] sm:$0xff]
        %v255 = vld [vmem:[%s251 + $0x8] sm:$0xff]
        %v256 = vld [vmem:[%s251 + $0x10] sm:$0xff]
        %v257 = vld [vmem:[%s251 + $0x18] sm:$0xff]
        %v258 = vld [vmem:[%s1] sm:$0xff]
        %v259 = vld [vmem:[%s1 + $0x8] sm:$0xff]
        %v260 = vld [vmem:[%s1 + $0x10] sm:$0xff]
        %v261 = vld [vmem:[%s1 + $0x18] sm:$0xff]
        %v262 = vld [vmem:[%s1 + $0x20] sm:$0xff]
        %v263 = vld [vmem:[%s1 + $0x28] sm:$0xff]
        %v264 = vld [vmem:[%s1 + $0x30] sm:$0xff]
        %v265 = vld [vmem:[%s1 + $0x38] sm:$0xff]
        %v266 = vld [vmem:[%s1 + $0x40] sm:$0xff]
        %v267 = vld [vmem:[%s1 + $0x48] sm:$0xff]
        %v268 = vld [vmem:[%s1 + $0x50] sm:$0xff]
        %v269 = vld [vmem:[%s1 + $0x58] sm:$0xff]
        %v270 = vld [vmem:[%s1 + $0x60] sm:$0xff]
        %v271 = vld [vmem:[%s1 + $0x68] sm:$0xff]
        %v272 = vld [vmem:[%s1 + $0x70] sm:$0xff]
        %v273 = vld [vmem:[%s1 + $0x78] sm:$0xff]
        %v274 = vld [vmem:[%s2] sm:$0xff]
        %v275 = vld [vmem:[%s2 + $0x8] sm:$0xff]
        %v276 = vld [vmem:[%s2 + $0x10] sm:$0xff]
        %v277 = vld [vmem:[%s2 + $0x18] sm:$0xff]
        %v278 = vld [vmem:[%s2 + $0x20] sm:$0xff]
        %v279 = vld [vmem:[%s2 + $0x28] sm:$0xff]
        %v280 = vld [vmem:[%s2 + $0x30] sm:$0xff]
        %v281 = vld [vmem:[%s2 + $0x38] sm:$0xff]
        %v282 = vld [vmem:[%s2 + $0x40] sm:$0xff]
        %v283 = vld [vmem:[%s2 + $0x48] sm:$0xff]
        %v284 = vld [vmem:[%s2 + $0x50] sm:$0xff]
        %v285 = vld [vmem:[%s2 + $0x58] sm:$0xff]
        %v286 = vld [vmem:[%s2 + $0x60] sm:$0xff]
        %v287 = vld [vmem:[%s2 + $0x68] sm:$0xff]
        %v288 = vld [vmem:[%s2 + $0x70] sm:$0xff]
        %v289 = vld [vmem:[%s2 + $0x78] sm:$0xff]
        %291 = vset.pattern.permute.xlu0 0
        %292 = vperm.xlu0 %291, %v274
        %v293 = vpop.permute.xlu0 %292
        %296 = vset.pattern.permute.xlu0 0
        %297 = vperm.xlu0 %296, %v275
        %v298 = vpop.permute.xlu0 %297
        %301 = vset.pattern.permute.xlu0 0
        %302 = vperm.xlu0 %301, %v276
        %v303 = vpop.permute.xlu0 %302
        %306 = vset.pattern.permute.xlu0 0
        %307 = vperm.xlu0 %306, %v277
        %v308 = vpop.permute.xlu0 %307
        %311 = vset.pattern.permute.xlu0 0
        %312 = vperm.xlu0 %311, %v278
        %v313 = vpop.permute.xlu0 %312
        %316 = vset.pattern.permute.xlu0 0
        %317 = vperm.xlu0 %316, %v279
        %v318 = vpop.permute.xlu0 %317
        %321 = vset.pattern.permute.xlu0 0
        %322 = vperm.xlu0 %321, %v280
        %v323 = vpop.permute.xlu0 %322
        %326 = vset.pattern.permute.xlu0 0
        %327 = vperm.xlu0 %326, %v281
        %v328 = vpop.permute.xlu0 %327
        %331 = vset.pattern.permute.xlu0 0
        %332 = vperm.xlu0 %331, %v282
        %v333 = vpop.permute.xlu0 %332
        %336 = vset.pattern.permute.xlu0 0
        %337 = vperm.xlu0 %336, %v283
        %v338 = vpop.permute.xlu0 %337
        %341 = vset.pattern.permute.xlu0 0
        %342 = vperm.xlu0 %341, %v284
        %v343 = vpop.permute.xlu0 %342
        %346 = vset.pattern.permute.xlu0 0
        %347 = vperm.xlu0 %346, %v285
        %v348 = vpop.permute.xlu0 %347
        %351 = vset.pattern.permute.xlu0 0
        %352 = vperm.xlu0 %351, %v286
        %v353 = vpop.permute.xlu0 %352
        %356 = vset.pattern.permute.xlu0 0
        %357 = vperm.xlu0 %356, %v287
        %v358 = vpop.permute.xlu0 %357
        %361 = vset.pattern.permute.xlu0 0
        %362 = vperm.xlu0 %361, %v288
        %v363 = vpop.permute.xlu0 %362
        %366 = vset.pattern.permute.xlu0 0
        %367 = vperm.xlu0 %366, %v289
        %v368 = vpop.permute.xlu0 %367
        %vm370 = vcmask 130048
        %v372 = vsel %vm370, %v258, 0
        %v375 = vsel %vm370, %v259, 0
        %v378 = vsel %vm370, %v260, 0
        %v381 = vsel %vm370, %v261, 0
        %v384 = vsel %vm370, %v262, 0
        %v387 = vsel %vm370, %v263, 0
        %v390 = vsel %vm370, %v264, 0
        %v393 = vsel %vm370, %v265, 0
        %v396 = vsel %vm370, %v266, 0
        %v399 = vsel %vm370, %v267, 0
        %v402 = vsel %vm370, %v268, 0
        %v405 = vsel %vm370, %v269, 0
        %v408 = vsel %vm370, %v270, 0
        %v411 = vsel %vm370, %v271, 0
        %v414 = vsel %vm370, %v272, 0
        %v417 = vsel %vm370, %v273, 0
        %419 = vmatprep.subr.mxu0 0.0
        %420 = vmatpush1.msra.mxu0 0.0
        %421 = vmatprep.subr.mxu0 0.0
        %422 = vmatpush1.msra.mxu0 0.0
        %423 = vmatprep.subr.mxu0 0.0
        %424 = vmatpush1.msra.mxu0 0.0
        %425 = vmatprep.subr.mxu0 0.0
        %426 = vmatpush1.msra.mxu0 0.0
        %427 = vmatprep.subr.mxu0 0.0
        %428 = vmatpush1.msra.mxu0 0.0
        %429 = vmatprep.subr.mxu0 0.0
        %430 = vmatpush1.msra.mxu0 0.0
        %431 = vmatprep.subr.mxu0 0.0
        %432 = vmatpush1.msra.mxu0 0.0
        %433 = vmatprep.subr.mxu0 0.0
        %434 = vmatpush1.msra.mxu0 0.0
        %435 = vmatprep.subr.mxu0 0.0
        %436 = vmatpush1.msra.mxu0 0.0
        %437 = vmatprep.subr.mxu0 0.0
        %438 = vmatpush1.msra.mxu0 0.0
        %439 = vmatprep.subr.mxu0 0.0
        %440 = vmatpush1.msra.mxu0 0.0
        %441 = vmatprep.subr.mxu0 0.0
        %442 = vmatpush1.msra.mxu0 0.0
        %443 = vmatprep.subr.mxu0 0.0
        %444 = vmatpush1.msra.mxu0 0.0
        %445 = vmatprep.subr.mxu0 0.0
        %446 = vmatpush1.msra.mxu0 0.0
        %447 = vmatprep.subr.mxu0 %v257
        %448 = vmatpush1.msra.mxu0 %v256
        %449 = vmatprep.subr.mxu0 %v255
        %450 = vmatpush1.msra.mxu0 %v254
        %451 = vmatprep.subr.mxu0 0.0
        %452 = vmatpush2.msra.mxu0 0.0
        %453 = vmatprep.subr.mxu0 0.0
        %454 = vmatpush2.msra.mxu0 0.0
        %455 = vmatprep.subr.mxu0 0.0
        %456 = vmatpush2.msra.mxu0 0.0
        %457 = vmatprep.subr.mxu0 0.0
        %458 = vmatpush2.msra.mxu0 0.0
        %459 = vmatprep.subr.mxu0 0.0
        %460 = vmatpush2.msra.mxu0 0.0
        %461 = vmatprep.subr.mxu0 0.0
        %462 = vmatpush2.msra.mxu0 0.0
        %463 = vmatprep.subr.mxu0 0.0
        %464 = vmatpush2.msra.mxu0 0.0
        %465 = vmatprep.subr.mxu0 0.0
        %466 = vmatpush2.msra.mxu0 0.0
        %467 = vmatprep.subr.mxu0 0.0
        %468 = vmatpush2.msra.mxu0 0.0
        %469 = vmatprep.subr.mxu0 0.0
        %470 = vmatpush2.msra.mxu0 0.0
        %471 = vmatprep.subr.mxu0 0.0
        %472 = vmatpush2.msra.mxu0 0.0
        %473 = vmatprep.subr.mxu0 0.0
        %474 = vmatpush2.msra.mxu0 0.0
        %475 = vmatprep.subr.mxu0 0.0
        %476 = vmatpush2.msra.mxu0 0.0
        %477 = vmatprep.subr.mxu0 0.0
        %478 = vmatpush2.msra.mxu0 0.0
        %479 = vmatprep.subr.mxu0 0.0
        %480 = vmatpush2.msra.mxu0 0.0
        %481 = vmatprep.subr.mxu0 0.0
        %482 = vmatpush2.msra.mxu0 0.0
        %483 = vmatprep.mubr.f32.mxu0 0.0
        %484 = vmatmul.mubr.f32.gmra.mxu0 %v372
        %v485 = vpop.f32.mrf.mxu0
        %v486 = vadd.f32 %v293, %v485
        %v487 = vpop.f32.mrf.mxu0
        %v488 = vadd.f32 %v293, %v487
        %489 = vmatprep.mubr.f32.mxu0 0.0
        %490 = vmatmul.mubr.f32.gmra.mxu0 %v375
        %v491 = vpop.f32.mrf.mxu0
        %v492 = vadd.f32 %v298, %v491
        %v493 = vpop.f32.mrf.mxu0
        %v494 = vadd.f32 %v298, %v493
        %495 = vmatprep.mubr.f32.mxu0 0.0
        %496 = vmatmul.mubr.f32.gmra.mxu0 %v378
        %v497 = vpop.f32.mrf.mxu0
        %v498 = vadd.f32 %v303, %v497
        %v499 = vpop.f32.mrf.mxu0
        %v500 = vadd.f32 %v303, %v499
        %501 = vmatprep.mubr.f32.mxu0 0.0
        %502 = vmatmul.mubr.f32.gmra.mxu0 %v381
        %v503 = vpop.f32.mrf.mxu0
        %v504 = vadd.f32 %v308, %v503
        %v505 = vpop.f32.mrf.mxu0
        %v506 = vadd.f32 %v308, %v505
        %507 = vmatprep.mubr.f32.mxu0 0.0
        %508 = vmatmul.mubr.f32.gmra.mxu0 %v384
        %v509 = vpop.f32.mrf.mxu0
        %v510 = vadd.f32 %v313, %v509
        %v511 = vpop.f32.mrf.mxu0
        %v512 = vadd.f32 %v313, %v511
        %513 = vmatprep.mubr.f32.mxu0 0.0
        %514 = vmatmul.mubr.f32.gmra.mxu0 %v387
        %v515 = vpop.f32.mrf.mxu0
        %v516 = vadd.f32 %v318, %v515
        %v517 = vpop.f32.mrf.mxu0
        %v518 = vadd.f32 %v318, %v517
        %519 = vmatprep.mubr.f32.mxu0 0.0
        %520 = vmatmul.mubr.f32.gmra.mxu0 %v390
        %v521 = vpop.f32.mrf.mxu0
        %v522 = vadd.f32 %v323, %v521
        %v523 = vpop.f32.mrf.mxu0
        %v524 = vadd.f32 %v323, %v523
        %525 = vmatprep.mubr.f32.mxu0 0.0
        %526 = vmatmul.mubr.f32.gmra.mxu0 %v393
        %v527 = vpop.f32.mrf.mxu0
        %v528 = vadd.f32 %v328, %v527
        %v529 = vpop.f32.mrf.mxu0
        %v530 = vadd.f32 %v328, %v529
        %531 = vmatprep.mubr.f32.mxu0 0.0
        %532 = vmatmul.mubr.f32.gmra.mxu0 %v396
        %v533 = vpop.f32.mrf.mxu0
        %v534 = vadd.f32 %v333, %v533
        %v535 = vpop.f32.mrf.mxu0
        %v536 = vadd.f32 %v333, %v535
        %537 = vmatprep.mubr.f32.mxu0 0.0
        %538 = vmatmul.mubr.f32.gmra.mxu0 %v399
        %v539 = vpop.f32.mrf.mxu0
        %v540 = vadd.f32 %v338, %v539
        %v541 = vpop.f32.mrf.mxu0
        %v542 = vadd.f32 %v338, %v541
        %543 = vmatprep.mubr.f32.mxu0 0.0
        %544 = vmatmul.mubr.f32.gmra.mxu0 %v402
        %v545 = vpop.f32.mrf.mxu0
        %v546 = vadd.f32 %v343, %v545
        %v547 = vpop.f32.mrf.mxu0
        %v548 = vadd.f32 %v343, %v547
        %549 = vmatprep.mubr.f32.mxu0 0.0
        %550 = vmatmul.mubr.f32.gmra.mxu0 %v405
        %v551 = vpop.f32.mrf.mxu0
        %v552 = vadd.f32 %v348, %v551
        %v553 = vpop.f32.mrf.mxu0
        %v554 = vadd.f32 %v348, %v553
        %555 = vmatprep.mubr.f32.mxu0 0.0
        %556 = vmatmul.mubr.f32.gmra.mxu0 %v408
        %v557 = vpop.f32.mrf.mxu0
        %v558 = vadd.f32 %v353, %v557
        %v559 = vpop.f32.mrf.mxu0
        %v560 = vadd.f32 %v353, %v559
        %561 = vmatprep.mubr.f32.mxu0 0.0
        %562 = vmatmul.mubr.f32.gmra.mxu0 %v411
        %v563 = vpop.f32.mrf.mxu0
        %v564 = vadd.f32 %v358, %v563
        %v565 = vpop.f32.mrf.mxu0
        %v566 = vadd.f32 %v358, %v565
        %567 = vmatprep.mubr.f32.mxu0 0.0
        %568 = vmatmul.mubr.f32.gmra.mxu0 %v414
        %v569 = vpop.f32.mrf.mxu0
        %v570 = vadd.f32 %v363, %v569
        %v571 = vpop.f32.mrf.mxu0
        %v572 = vadd.f32 %v363, %v571
        %573 = vmatprep.mubr.f32.mxu0 0.0
        %574 = vmatmul.mubr.f32.gmra.mxu0 %v417
        %v575 = vpop.f32.mrf.mxu0
        %v576 = vadd.f32 %v368, %v575
        %v577 = vpop.f32.mrf.mxu0
        %v578 = vadd.f32 %v368, %v577
        %579 = vdwg.mxu0
        %v580 = vmul.f32 %v486, 0.5
        %v581 = vmul.f32 %v488, 0.5
        %v582 = vmul.f32 %v492, 0.5
        %v583 = vmul.f32 %v494, 0.5
        %v584 = vmul.f32 %v498, 0.5
        %v585 = vmul.f32 %v500, 0.5
        %v586 = vmul.f32 %v504, 0.5
        %v587 = vmul.f32 %v506, 0.5
        %v588 = vmul.f32 %v510, 0.5
        %v589 = vmul.f32 %v512, 0.5
        %v590 = vmul.f32 %v516, 0.5
        %v591 = vmul.f32 %v518, 0.5
        %v592 = vmul.f32 %v522, 0.5
        %v593 = vmul.f32 %v524, 0.5
        %v594 = vmul.f32 %v528, 0.5
        %v595 = vmul.f32 %v530, 0.5
        %v596 = vmul.f32 %v534, 0.5
        %v597 = vmul.f32 %v536, 0.5
        %v598 = vmul.f32 %v540, 0.5
        %v599 = vmul.f32 %v542, 0.5
        %v600 = vmul.f32 %v546, 0.5
        %v601 = vmul.f32 %v548, 0.5
        %v602 = vmul.f32 %v552, 0.5
        %v603 = vmul.f32 %v554, 0.5
        %v604 = vmul.f32 %v558, 0.5
        %v605 = vmul.f32 %v560, 0.5
        %v606 = vmul.f32 %v564, 0.5
        %v607 = vmul.f32 %v566, 0.5
        %v608 = vmul.f32 %v570, 0.5
        %v609 = vmul.f32 %v572, 0.5
        %v610 = vmul.f32 %v576, 0.5
        %v611 = vmul.f32 %v578, 0.5
        %v612 = vtanh.pop %v580
        %v613 = vtanh.pop %v581
        %v614 = vtanh.pop %v582
        %v615 = vtanh.pop %v583
        %v616 = vtanh.pop %v584
        %v617 = vtanh.pop %v585
        %v618 = vtanh.pop %v586
        %v619 = vtanh.pop %v587
        %v620 = vtanh.pop %v588
        %v621 = vtanh.pop %v589
        %v622 = vtanh.pop %v590
        %v623 = vtanh.pop %v591
        %v624 = vtanh.pop %v592
        %v625 = vtanh.pop %v593
        %v626 = vtanh.pop %v594
        %v627 = vtanh.pop %v595
        %v628 = vtanh.pop %v596
        %v629 = vtanh.pop %v597
        %v630 = vtanh.pop %v598
        %v631 = vtanh.pop %v599
        %v632 = vtanh.pop %v600
        %v633 = vtanh.pop %v601
        %v634 = vtanh.pop %v602
        %v635 = vtanh.pop %v603
        %v636 = vtanh.pop %v604
        %v637 = vtanh.pop %v605
        %v638 = vtanh.pop %v606
        %v639 = vtanh.pop %v607
        %v640 = vtanh.pop %v608
        %v641 = vtanh.pop %v609
        %v642 = vtanh.pop %v610
        %v643 = vtanh.pop %v611
        %v644 = vadd.f32 %v612, 1.0
        %v645 = vadd.f32 %v613, 1.0
        %v646 = vadd.f32 %v614, 1.0
        %v647 = vadd.f32 %v615, 1.0
        %v648 = vadd.f32 %v616, 1.0
        %v649 = vadd.f32 %v617, 1.0
        %v650 = vadd.f32 %v618, 1.0
        %v651 = vadd.f32 %v619, 1.0
        %v652 = vadd.f32 %v620, 1.0
        %v653 = vadd.f32 %v621, 1.0
        %v654 = vadd.f32 %v622, 1.0
        %v655 = vadd.f32 %v623, 1.0
        %v656 = vadd.f32 %v624, 1.0
        %v657 = vadd.f32 %v625, 1.0
        %v658 = vadd.f32 %v626, 1.0
        %v659 = vadd.f32 %v627, 1.0
        %v660 = vadd.f32 %v628, 1.0
        %v661 = vadd.f32 %v629, 1.0
        %v662 = vadd.f32 %v630, 1.0
        %v663 = vadd.f32 %v631, 1.0
        %v664 = vadd.f32 %v632, 1.0
        %v665 = vadd.f32 %v633, 1.0
        %v666 = vadd.f32 %v634, 1.0
        %v667 = vadd.f32 %v635, 1.0
        %v668 = vadd.f32 %v636, 1.0
        %v669 = vadd.f32 %v637, 1.0
        %v670 = vadd.f32 %v638, 1.0
        %v671 = vadd.f32 %v639, 1.0
        %v672 = vadd.f32 %v640, 1.0
        %v673 = vadd.f32 %v641, 1.0
        %v674 = vadd.f32 %v642, 1.0
        %v675 = vadd.f32 %v643, 1.0
        %v676 = vmul.f32 %v580, %v644
        %v677 = vmul.f32 %v581, %v645
        %v678 = vmul.f32 %v582, %v646
        %v679 = vmul.f32 %v583, %v647
        %v680 = vmul.f32 %v584, %v648
        %v681 = vmul.f32 %v585, %v649
        %v682 = vmul.f32 %v586, %v650
        %v683 = vmul.f32 %v587, %v651
        %v684 = vmul.f32 %v588, %v652
        %v685 = vmul.f32 %v589, %v653
        %v686 = vmul.f32 %v590, %v654
        %v687 = vmul.f32 %v591, %v655
        %v688 = vmul.f32 %v592, %v656
        %v689 = vmul.f32 %v593, %v657
        %v690 = vmul.f32 %v594, %v658
        %v691 = vmul.f32 %v595, %v659
        %v692 = vmul.f32 %v596, %v660
        %v693 = vmul.f32 %v597, %v661
        %v694 = vmul.f32 %v598, %v662
        %v695 = vmul.f32 %v599, %v663
        %v696 = vmul.f32 %v600, %v664
        %v697 = vmul.f32 %v601, %v665
        %v698 = vmul.f32 %v602, %v666
        %v699 = vmul.f32 %v603, %v667
        %v700 = vmul.f32 %v604, %v668
        %v701 = vmul.f32 %v605, %v669
        %v702 = vmul.f32 %v606, %v670
        %v703 = vmul.f32 %v607, %v671
        %v704 = vmul.f32 %v608, %v672
        %v705 = vmul.f32 %v609, %v673
        %v706 = vmul.f32 %v610, %v674
        %v707 = vmul.f32 %v611, %v675
        %v708 = vld [vmem:[%s3] sm:$0xff]
        %v709 = vld [vmem:[%s3 + $0x8] sm:$0xff]
        %v710 = vld [vmem:[%s3 + $0x10] sm:$0xff]
        %v711 = vld [vmem:[%s3 + $0x18] sm:$0xff]
        %v712 = vld [vmem:[%s3 + $0x20] sm:$0xff]
        %v713 = vld [vmem:[%s3 + $0x28] sm:$0xff]
        %v714 = vld [vmem:[%s3 + $0x30] sm:$0xff]
        %v715 = vld [vmem:[%s3 + $0x38] sm:$0xff]
        %v716 = vld [vmem:[%s3 + $0x40] sm:$0xff]
        %v717 = vld [vmem:[%s3 + $0x48] sm:$0xff]
        %v718 = vld [vmem:[%s3 + $0x50] sm:$0xff]
        %v719 = vld [vmem:[%s3 + $0x58] sm:$0xff]
        %v720 = vld [vmem:[%s3 + $0x60] sm:$0xff]
        %v721 = vld [vmem:[%s3 + $0x68] sm:$0xff]
        %v722 = vld [vmem:[%s3 + $0x70] sm:$0xff]
        %v723 = vld [vmem:[%s3 + $0x78] sm:$0xff]
        %v724 = vld [vmem:[%s4] sm:$0xff]
        %v725 = vld [vmem:[%s4 + $0x8] sm:$0xff]
        %v726 = vld [vmem:[%s4 + $0x10] sm:$0xff]
        %v727 = vld [vmem:[%s4 + $0x18] sm:$0xff]
        %v728 = vld [vmem:[%s4 + $0x20] sm:$0xff]
        %v729 = vld [vmem:[%s4 + $0x28] sm:$0xff]
        %v730 = vld [vmem:[%s4 + $0x30] sm:$0xff]
        %v731 = vld [vmem:[%s4 + $0x38] sm:$0xff]
        %v732 = vld [vmem:[%s4 + $0x40] sm:$0xff]
        %v733 = vld [vmem:[%s4 + $0x48] sm:$0xff]
        %v734 = vld [vmem:[%s4 + $0x50] sm:$0xff]
        %v735 = vld [vmem:[%s4 + $0x58] sm:$0xff]
        %v736 = vld [vmem:[%s4 + $0x60] sm:$0xff]
        %v737 = vld [vmem:[%s4 + $0x68] sm:$0xff]
        %v738 = vld [vmem:[%s4 + $0x70] sm:$0xff]
        %v739 = vld [vmem:[%s4 + $0x78] sm:$0xff]
        %741 = vset.pattern.permute.xlu0 0
        %742 = vperm.xlu0 %741, %v724
        %v743 = vpop.permute.xlu0 %742
        %746 = vset.pattern.permute.xlu0 0
        %747 = vperm.xlu0 %746, %v725
        %v748 = vpop.permute.xlu0 %747
        %751 = vset.pattern.permute.xlu0 0
        %752 = vperm.xlu0 %751, %v726
        %v753 = vpop.permute.xlu0 %752
        %756 = vset.pattern.permute.xlu0 0
        %757 = vperm.xlu0 %756, %v727
        %v758 = vpop.permute.xlu0 %757
        %761 = vset.pattern.permute.xlu0 0
        %762 = vperm.xlu0 %761, %v728
        %v763 = vpop.permute.xlu0 %762
        %766 = vset.pattern.permute.xlu0 0
        %767 = vperm.xlu0 %766, %v729
        %v768 = vpop.permute.xlu0 %767
        %771 = vset.pattern.permute.xlu0 0
        %772 = vperm.xlu0 %771, %v730
        %v773 = vpop.permute.xlu0 %772
        %776 = vset.pattern.permute.xlu0 0
        %777 = vperm.xlu0 %776, %v731
        %v778 = vpop.permute.xlu0 %777
        %781 = vset.pattern.permute.xlu0 0
        %782 = vperm.xlu0 %781, %v732
        %v783 = vpop.permute.xlu0 %782
        %786 = vset.pattern.permute.xlu0 0
        %787 = vperm.xlu0 %786, %v733
        %v788 = vpop.permute.xlu0 %787
        %791 = vset.pattern.permute.xlu0 0
        %792 = vperm.xlu0 %791, %v734
        %v793 = vpop.permute.xlu0 %792
        %796 = vset.pattern.permute.xlu0 0
        %797 = vperm.xlu0 %796, %v735
        %v798 = vpop.permute.xlu0 %797
        %801 = vset.pattern.permute.xlu0 0
        %802 = vperm.xlu0 %801, %v736
        %v803 = vpop.permute.xlu0 %802
        %806 = vset.pattern.permute.xlu0 0
        %807 = vperm.xlu0 %806, %v737
        %v808 = vpop.permute.xlu0 %807
        %811 = vset.pattern.permute.xlu0 0
        %812 = vperm.xlu0 %811, %v738
        %v813 = vpop.permute.xlu0 %812
        %816 = vset.pattern.permute.xlu0 0
        %817 = vperm.xlu0 %816, %v739
        %v818 = vpop.permute.xlu0 %817
        %820 = vmatprep.subr.mxu0 %v707
        %821 = vmatpush1.msra.mxu0 %v706
        %822 = vmatprep.subr.mxu0 %v705
        %823 = vmatpush1.msra.mxu0 %v704
        %824 = vmatprep.subr.mxu0 %v703
        %825 = vmatpush1.msra.mxu0 %v702
        %826 = vmatprep.subr.mxu0 %v701
        %827 = vmatpush1.msra.mxu0 %v700
        %828 = vmatprep.subr.mxu0 %v699
        %829 = vmatpush1.msra.mxu0 %v698
        %830 = vmatprep.subr.mxu0 %v697
        %831 = vmatpush1.msra.mxu0 %v696
        %832 = vmatprep.subr.mxu0 %v695
        %833 = vmatpush1.msra.mxu0 %v694
        %834 = vmatprep.subr.mxu0 %v693
        %835 = vmatpush1.msra.mxu0 %v692
        %836 = vmatprep.subr.mxu0 %v691
        %837 = vmatpush1.msra.mxu0 %v690
        %838 = vmatprep.subr.mxu0 %v689
        %839 = vmatpush1.msra.mxu0 %v688
        %840 = vmatprep.subr.mxu0 %v687
        %841 = vmatpush1.msra.mxu0 %v686
        %842 = vmatprep.subr.mxu0 %v685
        %843 = vmatpush1.msra.mxu0 %v684
        %844 = vmatprep.subr.mxu0 %v683
        %845 = vmatpush1.msra.mxu0 %v682
        %846 = vmatprep.subr.mxu0 %v681
        %847 = vmatpush1.msra.mxu0 %v680
        %848 = vmatprep.subr.mxu0 %v679
        %849 = vmatpush1.msra.mxu0 %v678
        %850 = vmatprep.subr.mxu0 %v677
        %851 = vmatpush1.msra.mxu0 %v676
        %852 = vmatprep.subr.mxu0 0.0
        %853 = vmatpush2.msra.mxu0 0.0
        %854 = vmatprep.subr.mxu0 0.0
        %855 = vmatpush2.msra.mxu0 0.0
        %856 = vmatprep.subr.mxu0 0.0
        %857 = vmatpush2.msra.mxu0 0.0
        %858 = vmatprep.subr.mxu0 0.0
        %859 = vmatpush2.msra.mxu0 0.0
        %860 = vmatprep.subr.mxu0 0.0
        %861 = vmatpush2.msra.mxu0 0.0
        %862 = vmatprep.subr.mxu0 0.0
        %863 = vmatpush2.msra.mxu0 0.0
        %864 = vmatprep.subr.mxu0 0.0
        %865 = vmatpush2.msra.mxu0 0.0
        %866 = vmatprep.subr.mxu0 0.0
        %867 = vmatpush2.msra.mxu0 0.0
        %868 = vmatprep.subr.mxu0 0.0
        %869 = vmatpush2.msra.mxu0 0.0
        %870 = vmatprep.subr.mxu0 0.0
        %871 = vmatpush2.msra.mxu0 0.0
        %872 = vmatprep.subr.mxu0 0.0
        %873 = vmatpush2.msra.mxu0 0.0
        %874 = vmatprep.subr.mxu0 0.0
        %875 = vmatpush2.msra.mxu0 0.0
        %876 = vmatprep.subr.mxu0 0.0
        %877 = vmatpush2.msra.mxu0 0.0
        %878 = vmatprep.subr.mxu0 0.0
        %879 = vmatpush2.msra.mxu0 0.0
        %880 = vmatprep.subr.mxu0 0.0
        %881 = vmatpush2.msra.mxu0 0.0
        %882 = vmatprep.subr.mxu0 0.0
        %883 = vmatpush2.msra.mxu0 0.0
        %884 = vmatprep.mubr.f32.mxu0 0.0
        %885 = vmatmul.mubr.f32.gmra.mxu0 %v708
        %v886 = vpop.f32.mrf.mxu0
        %v887 = vadd.f32 %v743, %v886
        %v888 = vpop.f32.mrf.mxu0
        %v889 = vadd.f32 %v743, %v888
        %890 = vmatprep.mubr.f32.mxu0 0.0
        %891 = vmatmul.mubr.f32.gmra.mxu0 %v709
        %v892 = vpop.f32.mrf.mxu0
        %v893 = vadd.f32 %v748, %v892
        %v894 = vpop.f32.mrf.mxu0
        %v895 = vadd.f32 %v748, %v894
        %896 = vmatprep.mubr.f32.mxu0 0.0
        %897 = vmatmul.mubr.f32.gmra.mxu0 %v710
        %v898 = vpop.f32.mrf.mxu0
        %v899 = vadd.f32 %v753, %v898
        %v900 = vpop.f32.mrf.mxu0
        %v901 = vadd.f32 %v753, %v900
        %902 = vmatprep.mubr.f32.mxu0 0.0
        %903 = vmatmul.mubr.f32.gmra.mxu0 %v711
        %v904 = vpop.f32.mrf.mxu0
        %v905 = vadd.f32 %v758, %v904
        %v906 = vpop.f32.mrf.mxu0
        %v907 = vadd.f32 %v758, %v906
        %908 = vmatprep.mubr.f32.mxu0 0.0
        %909 = vmatmul.mubr.f32.gmra.mxu0 %v712
        %v910 = vpop.f32.mrf.mxu0
        %v911 = vadd.f32 %v763, %v910
        %v912 = vpop.f32.mrf.mxu0
        %v913 = vadd.f32 %v763, %v912
        %914 = vmatprep.mubr.f32.mxu0 0.0
        %915 = vmatmul.mubr.f32.gmra.mxu0 %v713
        %v916 = vpop.f32.mrf.mxu0
        %v917 = vadd.f32 %v768, %v916
        %v918 = vpop.f32.mrf.mxu0
        %v919 = vadd.f32 %v768, %v918
        %920 = vmatprep.mubr.f32.mxu0 0.0
        %921 = vmatmul.mubr.f32.gmra.mxu0 %v714
        %v922 = vpop.f32.mrf.mxu0
        %v923 = vadd.f32 %v773, %v922
        %v924 = vpop.f32.mrf.mxu0
        %v925 = vadd.f32 %v773, %v924
        %926 = vmatprep.mubr.f32.mxu0 0.0
        %927 = vmatmul.mubr.f32.gmra.mxu0 %v715
        %v928 = vpop.f32.mrf.mxu0
        %v929 = vadd.f32 %v778, %v928
        %v930 = vpop.f32.mrf.mxu0
        %v931 = vadd.f32 %v778, %v930
        %932 = vmatprep.mubr.f32.mxu0 0.0
        %933 = vmatmul.mubr.f32.gmra.mxu0 %v716
        %v934 = vpop.f32.mrf.mxu0
        %v935 = vadd.f32 %v783, %v934
        %v936 = vpop.f32.mrf.mxu0
        %v937 = vadd.f32 %v783, %v936
        %938 = vmatprep.mubr.f32.mxu0 0.0
        %939 = vmatmul.mubr.f32.gmra.mxu0 %v717
        %v940 = vpop.f32.mrf.mxu0
        %v941 = vadd.f32 %v788, %v940
        %v942 = vpop.f32.mrf.mxu0
        %v943 = vadd.f32 %v788, %v942
        %944 = vmatprep.mubr.f32.mxu0 0.0
        %945 = vmatmul.mubr.f32.gmra.mxu0 %v718
        %v946 = vpop.f32.mrf.mxu0
        %v947 = vadd.f32 %v793, %v946
        %v948 = vpop.f32.mrf.mxu0
        %v949 = vadd.f32 %v793, %v948
        %950 = vmatprep.mubr.f32.mxu0 0.0
        %951 = vmatmul.mubr.f32.gmra.mxu0 %v719
        %v952 = vpop.f32.mrf.mxu0
        %v953 = vadd.f32 %v798, %v952
        %v954 = vpop.f32.mrf.mxu0
        %v955 = vadd.f32 %v798, %v954
        %956 = vmatprep.mubr.f32.mxu0 0.0
        %957 = vmatmul.mubr.f32.gmra.mxu0 %v720
        %v958 = vpop.f32.mrf.mxu0
        %v959 = vadd.f32 %v803, %v958
        %v960 = vpop.f32.mrf.mxu0
        %v961 = vadd.f32 %v803, %v960
        %962 = vmatprep.mubr.f32.mxu0 0.0
        %963 = vmatmul.mubr.f32.gmra.mxu0 %v721
        %v964 = vpop.f32.mrf.mxu0
        %v965 = vadd.f32 %v808, %v964
        %v966 = vpop.f32.mrf.mxu0
        %v967 = vadd.f32 %v808, %v966
        %968 = vmatprep.mubr.f32.mxu0 0.0
        %969 = vmatmul.mubr.f32.gmra.mxu0 %v722
        %v970 = vpop.f32.mrf.mxu0
        %v971 = vadd.f32 %v813, %v970
        %v972 = vpop.f32.mrf.mxu0
        %v973 = vadd.f32 %v813, %v972
        %974 = vmatprep.mubr.f32.mxu0 0.0
        %975 = vmatmul.mubr.f32.gmra.mxu0 %v723
        %v976 = vpop.f32.mrf.mxu0
        %v977 = vadd.f32 %v818, %v976
        %v978 = vpop.f32.mrf.mxu0
        %v979 = vadd.f32 %v818, %v978
        %980 = vdwg.mxu0
        %v981 = vmul.f32 %v887, 0.5
        %v982 = vmul.f32 %v889, 0.5
        %v983 = vmul.f32 %v893, 0.5
        %v984 = vmul.f32 %v895, 0.5
        %v985 = vmul.f32 %v899, 0.5
        %v986 = vmul.f32 %v901, 0.5
        %v987 = vmul.f32 %v905, 0.5
        %v988 = vmul.f32 %v907, 0.5
        %v989 = vmul.f32 %v911, 0.5
        %v990 = vmul.f32 %v913, 0.5
        %v991 = vmul.f32 %v917, 0.5
        %v992 = vmul.f32 %v919, 0.5
        %v993 = vmul.f32 %v923, 0.5
        %v994 = vmul.f32 %v925, 0.5
        %v995 = vmul.f32 %v929, 0.5
        %v996 = vmul.f32 %v931, 0.5
        %v997 = vmul.f32 %v935, 0.5
        %v998 = vmul.f32 %v937, 0.5
        %v999 = vmul.f32 %v941, 0.5
        %v1000 = vmul.f32 %v943, 0.5
        %v1001 = vmul.f32 %v947, 0.5
        %v1002 = vmul.f32 %v949, 0.5
        %v1003 = vmul.f32 %v953, 0.5
        %v1004 = vmul.f32 %v955, 0.5
        %v1005 = vmul.f32 %v959, 0.5
        %v1006 = vmul.f32 %v961, 0.5
        %v1007 = vmul.f32 %v965, 0.5
        %v1008 = vmul.f32 %v967, 0.5
        %v1009 = vmul.f32 %v971, 0.5
        %v1010 = vmul.f32 %v973, 0.5
        %v1011 = vmul.f32 %v977, 0.5
        %v1012 = vmul.f32 %v979, 0.5
        %v1013 = vtanh.pop %v981
        %v1014 = vtanh.pop %v982
        %v1015 = vtanh.pop %v983
        %v1016 = vtanh.pop %v984
        %v1017 = vtanh.pop %v985
        %v1018 = vtanh.pop %v986
        %v1019 = vtanh.pop %v987
        %v1020 = vtanh.pop %v988
        %v1021 = vtanh.pop %v989
        %v1022 = vtanh.pop %v990
        %v1023 = vtanh.pop %v991
        %v1024 = vtanh.pop %v992
        %v1025 = vtanh.pop %v993
        %v1026 = vtanh.pop %v994
        %v1027 = vtanh.pop %v995
        %v1028 = vtanh.pop %v996
        %v1029 = vtanh.pop %v997
        %v1030 = vtanh.pop %v998
        %v1031 = vtanh.pop %v999
        %v1032 = vtanh.pop %v1000
        %v1033 = vtanh.pop %v1001
        %v1034 = vtanh.pop %v1002
        %v1035 = vtanh.pop %v1003
        %v1036 = vtanh.pop %v1004
        %v1037 = vtanh.pop %v1005
        %v1038 = vtanh.pop %v1006
        %v1039 = vtanh.pop %v1007
        %v1040 = vtanh.pop %v1008
        %v1041 = vtanh.pop %v1009
        %v1042 = vtanh.pop %v1010
        %v1043 = vtanh.pop %v1011
        %v1044 = vtanh.pop %v1012
        %v1045 = vadd.f32 %v1013, 1.0
        %v1046 = vadd.f32 %v1014, 1.0
        %v1047 = vadd.f32 %v1015, 1.0
        %v1048 = vadd.f32 %v1016, 1.0
        %v1049 = vadd.f32 %v1017, 1.0
        %v1050 = vadd.f32 %v1018, 1.0
        %v1051 = vadd.f32 %v1019, 1.0
        %v1052 = vadd.f32 %v1020, 1.0
        %v1053 = vadd.f32 %v1021, 1.0
        %v1054 = vadd.f32 %v1022, 1.0
        %v1055 = vadd.f32 %v1023, 1.0
        %v1056 = vadd.f32 %v1024, 1.0
        %v1057 = vadd.f32 %v1025, 1.0
        %v1058 = vadd.f32 %v1026, 1.0
        %v1059 = vadd.f32 %v1027, 1.0
        %v1060 = vadd.f32 %v1028, 1.0
        %v1061 = vadd.f32 %v1029, 1.0
        %v1062 = vadd.f32 %v1030, 1.0
        %v1063 = vadd.f32 %v1031, 1.0
        %v1064 = vadd.f32 %v1032, 1.0
        %v1065 = vadd.f32 %v1033, 1.0
        %v1066 = vadd.f32 %v1034, 1.0
        %v1067 = vadd.f32 %v1035, 1.0
        %v1068 = vadd.f32 %v1036, 1.0
        %v1069 = vadd.f32 %v1037, 1.0
        %v1070 = vadd.f32 %v1038, 1.0
        %v1071 = vadd.f32 %v1039, 1.0
        %v1072 = vadd.f32 %v1040, 1.0
        %v1073 = vadd.f32 %v1041, 1.0
        %v1074 = vadd.f32 %v1042, 1.0
        %v1075 = vadd.f32 %v1043, 1.0
        %v1076 = vadd.f32 %v1044, 1.0
        %v1077 = vmul.f32 %v981, %v1045
        %v1078 = vmul.f32 %v982, %v1046
        %v1079 = vmul.f32 %v983, %v1047
        %v1080 = vmul.f32 %v984, %v1048
        %v1081 = vmul.f32 %v985, %v1049
        %v1082 = vmul.f32 %v986, %v1050
        %v1083 = vmul.f32 %v987, %v1051
        %v1084 = vmul.f32 %v988, %v1052
        %v1085 = vmul.f32 %v989, %v1053
        %v1086 = vmul.f32 %v990, %v1054
        %v1087 = vmul.f32 %v991, %v1055
        %v1088 = vmul.f32 %v992, %v1056
        %v1089 = vmul.f32 %v993, %v1057
        %v1090 = vmul.f32 %v994, %v1058
        %v1091 = vmul.f32 %v995, %v1059
        %v1092 = vmul.f32 %v996, %v1060
        %v1093 = vmul.f32 %v997, %v1061
        %v1094 = vmul.f32 %v998, %v1062
        %v1095 = vmul.f32 %v999, %v1063
        %v1096 = vmul.f32 %v1000, %v1064
        %v1097 = vmul.f32 %v1001, %v1065
        %v1098 = vmul.f32 %v1002, %v1066
        %v1099 = vmul.f32 %v1003, %v1067
        %v1100 = vmul.f32 %v1004, %v1068
        %v1101 = vmul.f32 %v1005, %v1069
        %v1102 = vmul.f32 %v1006, %v1070
        %v1103 = vmul.f32 %v1007, %v1071
        %v1104 = vmul.f32 %v1008, %v1072
        %v1105 = vmul.f32 %v1009, %v1073
        %v1106 = vmul.f32 %v1010, %v1074
        %v1107 = vmul.f32 %v1011, %v1075
        %v1108 = vmul.f32 %v1012, %v1076
        %1109 = vxpose.xlu0.b32.start [1/16] %v1077, 128
        %1110 = vxpose.xlu0.b32.cont [2/16] %v1079, 128
        %1111 = vxpose.xlu0.b32.cont [3/16] %v1081, 128
        %1112 = vxpose.xlu0.b32.cont [4/16] %v1083, 128
        %1113 = vxpose.xlu0.b32.cont [5/16] %v1085, 128
        %1114 = vxpose.xlu0.b32.cont [6/16] %v1087, 128
        %1115 = vxpose.xlu0.b32.cont [7/16] %v1089, 128
        %1116 = vxpose.xlu0.b32.cont [8/16] %v1091, 128
        %1117 = vxpose.xlu0.b32.cont [9/16] %v1093, 128
        %1118 = vxpose.xlu0.b32.cont [10/16] %v1095, 128
        %1119 = vxpose.xlu0.b32.cont [11/16] %v1097, 128
        %1120 = vxpose.xlu0.b32.cont [12/16] %v1099, 128
        %1121 = vxpose.xlu0.b32.cont [13/16] %v1101, 128
        %1122 = vxpose.xlu0.b32.cont [14/16] %v1103, 128
        %1123 = vxpose.xlu0.b32.cont [15/16] %v1105, 128
        %1124 = vxpose.xlu0.b32.end [16/16] %v1107, 128
        %v1125 = vpop.trf.xlu0
        %v1126 = vpop.trf.xlu0
        %v1127 = vpop.trf.xlu0
        %v1128 = vpop.trf.xlu0
        %v1129 = vpop.trf.xlu0
        %v1130 = vpop.trf.xlu0
        %v1131 = vpop.trf.xlu0
        %v1132 = vpop.trf.xlu0
        %v1133 = vpop.trf.xlu0
        %v1134 = vpop.trf.xlu0
        %v1135 = vpop.trf.xlu0
        %v1136 = vpop.trf.xlu0
        %v1137 = vpop.trf.xlu0
        %v1138 = vpop.trf.xlu0
        %v1139 = vpop.trf.xlu0
        %v1140 = vpop.trf.xlu0
        %1141 = vxpose.xlu0.b32.start [1/16] %v1078, 128
        %1142 = vxpose.xlu0.b32.cont [2/16] %v1080, 128
        %1143 = vxpose.xlu0.b32.cont [3/16] %v1082, 128
        %1144 = vxpose.xlu0.b32.cont [4/16] %v1084, 128
        %1145 = vxpose.xlu0.b32.cont [5/16] %v1086, 128
        %1146 = vxpose.xlu0.b32.cont [6/16] %v1088, 128
        %1147 = vxpose.xlu0.b32.cont [7/16] %v1090, 128
        %1148 = vxpose.xlu0.b32.cont [8/16] %v1092, 128
        %1149 = vxpose.xlu0.b32.cont [9/16] %v1094, 128
        %1150 = vxpose.xlu0.b32.cont [10/16] %v1096, 128
        %1151 = vxpose.xlu0.b32.cont [11/16] %v1098, 128
        %1152 = vxpose.xlu0.b32.cont [12/16] %v1100, 128
        %1153 = vxpose.xlu0.b32.cont [13/16] %v1102, 128
        %1154 = vxpose.xlu0.b32.cont [14/16] %v1104, 128
        %1155 = vxpose.xlu0.b32.cont [15/16] %v1106, 128
        %1156 = vxpose.xlu0.b32.end [16/16] %v1108, 128
        %v1157 = vpop.trf.xlu0
        %v1158 = vpop.trf.xlu0
        %v1159 = vpop.trf.xlu0
        %v1160 = vpop.trf.xlu0
        %v1161 = vpop.trf.xlu0
        %v1162 = vpop.trf.xlu0
        %v1163 = vpop.trf.xlu0
        %v1164 = vpop.trf.xlu0
        %v1165 = vpop.trf.xlu0
        %v1166 = vpop.trf.xlu0
        %v1167 = vpop.trf.xlu0
        %v1168 = vpop.trf.xlu0
        %v1169 = vpop.trf.xlu0
        %v1170 = vpop.trf.xlu0
        %v1171 = vpop.trf.xlu0
        %v1172 = vpop.trf.xlu0
        %1173 = vst [vmem:[%s242] sm:$0xff] %v1125
        %1174 = vst [vmem:[%s242 + $0x8] sm:$0xff] %v1126
        %1175 = vst [vmem:[%s242 + $0x10] sm:$0xff] %v1127
        %1176 = vst [vmem:[%s242 + $0x18] sm:$0xff] %v1128
        %1177 = vst [vmem:[%s242 + $0x20] sm:$0xff] %v1129
        %1178 = vst [vmem:[%s242 + $0x28] sm:$0xff] %v1130
        %1179 = vst [vmem:[%s242 + $0x30] sm:$0xff] %v1131
        %1180 = vst [vmem:[%s242 + $0x38] sm:$0xff] %v1132
        %1181 = vst [vmem:[%s242 + $0x40] sm:$0xff] %v1133
        %1182 = vst [vmem:[%s242 + $0x48] sm:$0xff] %v1134
        %1183 = vst [vmem:[%s242 + $0x50] sm:$0xff] %v1135
        %1184 = vst [vmem:[%s242 + $0x58] sm:$0xff] %v1136
        %1185 = vst [vmem:[%s242 + $0x60] sm:$0xff] %v1137
        %1186 = vst [vmem:[%s242 + $0x68] sm:$0xff] %v1138
        %1187 = vst [vmem:[%s242 + $0x70] sm:$0xff] %v1139
        %1188 = vst [vmem:[%s242 + $0x78] sm:$0xff] %v1140
        %1189 = vst [vmem:[%s242 + $0x80] sm:$0xff] %v1157
        %1190 = vst [vmem:[%s242 + $0x88] sm:$0xff] %v1158
        %1191 = vst [vmem:[%s242 + $0x90] sm:$0xff] %v1159
        %1192 = vst [vmem:[%s242 + $0x98] sm:$0xff] %v1160
        %1193 = vst [vmem:[%s242 + $0xa0] sm:$0xff] %v1161
        %1194 = vst [vmem:[%s242 + $0xa8] sm:$0xff] %v1162
        %1195 = vst [vmem:[%s242 + $0xb0] sm:$0xff] %v1163
        %1196 = vst [vmem:[%s242 + $0xb8] sm:$0xff] %v1164
        %1197 = vst [vmem:[%s242 + $0xc0] sm:$0xff] %v1165
        %1198 = vst [vmem:[%s242 + $0xc8] sm:$0xff] %v1166
        %1199 = vst [vmem:[%s242 + $0xd0] sm:$0xff] %v1167
        %1200 = vst [vmem:[%s242 + $0xd8] sm:$0xff] %v1168
        %1201 = vst [vmem:[%s242 + $0xe0] sm:$0xff] %v1169
        %1202 = vst [vmem:[%s242 + $0xe8] sm:$0xff] %v1170
        %1203 = vst [vmem:[%s242 + $0xf0] sm:$0xff] %v1171
        %1204 = vst [vmem:[%s242 + $0xf8] sm:$0xff] %v1172
        %s1205 = sand.u32 %s153, 1
        %s1206 = scalar_lea.sflag [#allocation3], %s1205
        %s1207 = sand.u32 %s153, 1
        %s1208 = smul.addr %s1207, 256
        %s1209 = scalar_lea.vmem [#allocation2], %s1208
        // Predicated region
        $region41: #{tpu_custom_call.1} parent=39 // pred_check
          %p1210 = pneg %p163
        $region42: #{tpu_custom_call.1} parent=39 // pred_check_branch
          %1212 = sbr.rel (%p1210) target = $region44
        $region43: #{tpu_custom_call.1} parent=39 // pred_region
          %s1213 = smul.u32 32, %s24
          %s1215 = ssub.s32 4096, 4096
          %1216 = vsyncadd %s1206, %s1215
          %s1217 = smul.addr %s23, 32
          %s1218 = sadd.s32 %s1213, %s1217
          %s1219 = smul.addr %s1218, 128
          %s1220 = scalar_lea.hbm %s5, %s1219
          %s1221 = sshll.u32 %s1209, 4
          %s1222 = int_to_ptr.vmem [resolvable:$true] %s1221
          %1227 = dma.vmem_to_hbm [thread:$0]  %s1222, 4096, %s1220, %s1206, 128, 128, 8
        $region44: #{tpu_custom_call.1} parent=39 // pred_fallthru
          _
      $region40: #{tpu_custom_call.1} parent=5 // pred_fallthru
        _
      %p1228 = scmp.le.s32.totalorder 2, %s14
      // Predicated region
      $region45: #{tpu_custom_call.1} parent=5 // pred_check
        %p1229 = pneg %p1228
      $region46: #{tpu_custom_call.1} parent=5 // pred_check_branch
        %1231 = sbr.rel (%p1229) target = $region48
      $region47: #{tpu_custom_call.1} parent=5 // pred_region
        %s1232 = ssub.s32 %s14, 2
        // Predicated region
        $region49: #{tpu_custom_call.1} parent=47 // pred_check
          %p1233 = pneg %p169
        $region50: #{tpu_custom_call.1} parent=47 // pred_check_branch
          %1235 = sbr.rel (%p1233) target = $region52
        $region51: #{tpu_custom_call.1} parent=47 // pred_region
          %s1236 = sand.u32 %s154, 1
          %s1237 = scalar_lea.sflag [#allocation3], %s1236
          %s1238 = sand.u32 %s154, 1
          %s1239 = smul.addr %s1238, 256
          %s1240 = scalar_lea.vmem [#allocation2], %s1239
          %1241 = dma.done %s1237, 4096
        $region52: #{tpu_custom_call.1} parent=47 // pred_fallthru
          _
      $region48: #{tpu_custom_call.1} parent=5 // pred_fallthru
        _
    $region6: #{tpu_custom_call.1} parent=1 // loop_footer
      %s18 = sadd.s32 1, %s14
    $region7: #{tpu_custom_call.1} parent=1 // loop_footer_branch
      %13 = sbr.rel target = $region3
    $region8: #{tpu_custom_call.1} parent=1 // loop_exit
      _
    %1242 = vsyncpa [#allocation3], 1
    %s1243 = scalar_lea.sflag [#allocation3], 1
    %1244 = vsyncpa %s1243, 1

</llo_original>
